<compile_context>
chip_gen: v7x
topology: tpu7x:2x2x1
jax: 0.10.0
libtpu: 0.0.40
codegen_flags: <defaults>
</compile_context>

<pallas_src>
import jax
import jax.numpy as jnp
from jax.experimental import pallas as pl
from jax.experimental.pallas import tpu as pltpu

IN_FEATURES = 8
OUT_FEATURES = 1
ROWS_PER_LANE_ROW = 16                       # 16 rows x 8 features = 128 lanes
LANES = ROWS_PER_LANE_ROW * IN_FEATURES      # 128
DEFAULT_TB = 8192                            # 8192 * 128 * 4 B = 4 MiB f32 block


def _round_up(a, b):
    return ((a + b - 1) // b) * b


def _affinity_geom_kernel(x_ref, s_ref, b_ref, o_ref):
    # x_ref: (tb, 128) input dtype -- 16 complete input rows per 128-lane row.
    # s_ref: (128, 16) f32 tiled weight, constant index_map -> fetched once.
    # b_ref: (1,)      f32 SMEM scalar bias.
    # o_ref: (tb, 16)  output block (input row r = 16*i + j lands at o[i, j]).
    x = x_ref[...].astype(jnp.float32)
    y = jnp.dot(x, s_ref[...], preferred_element_type=jnp.float32)   # MXU
    y = y + b_ref[0]
    o_ref[...] = jnp.maximum(y, 0.0).astype(o_ref.dtype)


def affinity_geom_forward(inputs, weight, bias, *, tb=DEFAULT_TB):
    """relu(inputs @ weight.T + bias). inputs: (..., 8); weight: (1, 8); bias: (1,)."""
    lead_shape = inputs.shape[:-1]
    out_dtype = inputs.dtype

    x_flat = inputs.reshape(-1)                       # contiguous, free
    n = x_flat.shape[0] // IN_FEATURES                # total rows
    n_tail = n % ROWS_PER_LANE_ROW                    # <= 15 leftover rows
    n_main = n - n_tail
    m = n_main // ROWS_PER_LANE_ROW                   # rows of the (m, 128) slab

    w_f32 = weight.astype(jnp.float32).reshape(OUT_FEATURES, IN_FEATURES)
    b_f32 = bias.astype(jnp.float32).reshape(OUT_FEATURES)

    pieces = []

    if m > 0:
        # Free reshape when there is no tail; otherwise a cheap prefix slice.
        x_main_flat = x_flat if n_tail == 0 else x_flat[: m * LANES]
        x_main = x_main_flat.reshape(m, LANES)

        # Tiled weight: S[8*j + f, j] = w[f]  ->  (128, 16).
        s = jnp.kron(jnp.eye(ROWS_PER_LANE_ROW, dtype=jnp.float32),
                     w_f32.reshape(IN_FEATURES, OUT_FEATURES))

        # Fixed 4 MiB tile cap; split mid-size inputs into 2 balanced blocks so
        # both v7x TensorCores get work (no-op on 1-TC v5e/v6e).
        tb_eff = min(tb, _round_up(max(pl.cdiv(m, 2), 1), 8))
        num_blocks = pl.cdiv(m, tb_eff)

        in_itemsize = jnp.dtype(inputs.dtype).itemsize
        cost = pl.CostEstimate(
            flops=2 * m * LANES * ROWS_PER_LANE_ROW,
            transcendentals=0,
            bytes_accessed=(m * LANES * in_itemsize
                            + m * ROWS_PER_LANE_ROW * jnp.dtype(out_dtype).itemsize
                            + LANES * ROWS_PER_LANE_ROW * 4 + 4),
        )

        out_main = pl.pallas_call(
            _affinity_geom_kernel,
            out_shape=jax.ShapeDtypeStruct((m, ROWS_PER_LANE_ROW), out_dtype),
            grid_spec=pltpu.PrefetchScalarGridSpec(
                num_scalar_prefetch=0,
                grid=(num_blocks,),
                in_specs=[
                    pl.BlockSpec((tb_eff, LANES), lambda i: (i, 0)),
                    pl.BlockSpec((LANES, ROWS_PER_LANE_ROW), lambda i: (0, 0)),
                    pl.BlockSpec(memory_space=pltpu.MemorySpace.SMEM),
                ],
                out_specs=pl.BlockSpec((tb_eff, ROWS_PER_LANE_ROW),
                                       lambda i: (i, 0)),
            ),
            compiler_params=pltpu.CompilerParams(
                dimension_semantics=("parallel",)),
            cost_estimate=cost,
        )(x_main, s, b_f32)

        pieces.append(out_main.reshape(n_main))

    if n_tail > 0:
        # <= 15 leftover rows: plain jnp, negligible cost, no padding pass.
        x_tail = x_flat[m * LANES:].reshape(n_tail, IN_FEATURES)
        y_tail = x_tail.astype(jnp.float32) @ w_f32.T + b_f32
        pieces.append(jnp.maximum(y_tail, 0.0).astype(out_dtype).reshape(n_tail))

    if not pieces:
        return jnp.zeros((*lead_shape, OUT_FEATURES), out_dtype)

    out_flat = pieces[0] if len(pieces) == 1 else jnp.concatenate(pieces)
    return out_flat.reshape(*lead_shape, OUT_FEATURES)


def _init_params(key):
    # Deterministic init mimicking nn.Linear default: U(-1/sqrt(in), 1/sqrt(in)).
    kw, kb = jax.random.split(key)
    bound = 1.0 / jnp.sqrt(jnp.float32(IN_FEATURES))
    weight = jax.random.uniform(
        kw, (OUT_FEATURES, IN_FEATURES), jnp.float32, -bound, bound)
    bias = jax.random.uniform(
        kb, (OUT_FEATURES,), jnp.float32, -bound, bound)
    return weight, bias


def _reference(x, weight, bias):
    return jnp.maximum(x @ weight.T + bias, 0.0)


if __name__ == "__main__":
    key = jax.random.PRNGKey(0)
    k_in, k_in2, k_param = jax.random.split(key, 3)

    weight, bias = _init_params(k_param)

    # Small shape consistent with the module: (..., 8) features.
    batch, seq = 2, 8
    x = jax.random.normal(k_in, (batch, seq, IN_FEATURES), jnp.float32)
    out = jax.block_until_ready(affinity_geom_forward(x, weight, bias))
    ref = _reference(x, weight, bias)
    assert out.shape == (batch, seq, OUT_FEATURES)
    assert jnp.allclose(out, ref, atol=1e-5, rtol=1e-5)

    # Second shape whose row count is not a multiple of 16 (exercises the
    # jnp tail path alongside the kernel).
    x2 = jax.random.normal(k_in2, (3, 7, IN_FEATURES), jnp.float32)
    out2 = jax.block_until_ready(affinity_geom_forward(x2, weight, bias))
    ref2 = _reference(x2, weight, bias)
    assert out2.shape == (3, 7, OUT_FEATURES)
    assert jnp.allclose(out2, ref2, atol=1e-5, rtol=1e-5)

    print("KERNEL_OK")
</pallas_src>

<mosaic_0001>
module attributes {stable_mosaic.version = 11 : i64} {
  func.func @_affinity_geom_kernel(%arg0: i32, %arg1: memref<8x128xf32, #tpu.memory_space<vmem>>, %arg2: memref<128x16xf32, #tpu.memory_space<vmem>>, %arg3: memref<1xf32, #tpu.memory_space<smem>>, %arg4: memref<8x16xf32, #tpu.memory_space<vmem>>) attributes {dimension_semantics = [#tpu.dimension_semantics<parallel>], iteration_bounds = array<i64: 1>, scalar_prefetch = 0 : i64, scratch_operands = 0 : i64, tpu.core_type = #tpu.core_type<tc>, window_params = [{transform_indices = @transform_0, window_bounds = array<i64: 8, 128>}, {pipeline_mode = #tpu.pipeline_mode<synchronous>, transform_indices = @transform_1, window_bounds = array<i64: 128, 16>}, {transform_indices = @transform_2, window_bounds = array<i64: 1>}, {transform_indices = @transform_3, window_bounds = array<i64: 8, 16>}]} {
    %c0 = arith.constant 0 : index
    %c0_0 = arith.constant 0 : index
    %0 = vector.load %arg1[%c0, %c0_0] : memref<8x128xf32, #tpu.memory_space<vmem>>, vector<8x128xf32>
    %c0_1 = arith.constant 0 : index
    %c0_2 = arith.constant 0 : index
    %1 = vector.load %arg2[%c0_1, %c0_2] : memref<128x16xf32, #tpu.memory_space<vmem>>, vector<128x16xf32>
    %cst = arith.constant dense<0.000000e+00> : vector<8x16xf32>
    %2 = tpu.matmul %0, %1, %cst {dimension_numbers = #tpu.dot_dimension_numbers<[1], [0], [0], [1], [0, 0, 1, 1], [], []>} : vector<8x128xf32>, vector<128x16xf32>, vector<8x16xf32> -> vector<8x16xf32>
    %c0_3 = arith.constant 0 : index
    %3 = memref.load %arg3[%c0_3] : memref<1xf32, #tpu.memory_space<smem>>
    %4 = vector.broadcast %3 : f32 to vector<8x16xf32>
    %5 = arith.addf %2, %4 : vector<8x16xf32>
    %cst_4 = arith.constant 0.000000e+00 : f32
    %6 = vector.broadcast %cst_4 : f32 to vector<8x16xf32>
    %7 = arith.maximumf %5, %6 : vector<8x16xf32>
    %c0_5 = arith.constant 0 : index
    %c0_6 = arith.constant 0 : index
    %8 = vector.load %arg4[%c0_5, %c0_6] : memref<8x16xf32, #tpu.memory_space<vmem>>, vector<8x16xf32>
    tpu.vector_store %arg4[%c0_5, %c0_6], %7 {strides = array<i32>} : memref<8x16xf32, #tpu.memory_space<vmem>>, vector<8x16xf32>,
    return
  }
  func.func @transform_0(%arg0: i32) -> (i32, i32) {
    %c0_i32 = arith.constant 0 : i32
    %c0_i32_0 = arith.constant 0 : i32
    return %arg0, %c0_i32 : i32, i32
  }
  func.func @transform_1(%arg0: i32) -> (i32, i32) {
    %c0_i32 = arith.constant 0 : i32
    %c0_i32_0 = arith.constant 0 : i32
    %c0_i32_1 = arith.constant 0 : i32
    return %c0_i32, %c0_i32_0 : i32, i32
  }
  func.func @transform_2(%arg0: i32) -> i32 {
    %c0_i32 = arith.constant 0 : i32
    %c0_i32_0 = arith.constant 0 : i32
    return %c0_i32 : i32
  }
  func.func @transform_3(%arg0: i32) -> (i32, i32) {
    %c0_i32 = arith.constant 0 : i32
    %c0_i32_0 = arith.constant 0 : i32
    return %arg0, %c0_i32 : i32, i32
  }
}

</mosaic_0001>

<llo_original>
// kernel: tpu_custom_call.1
$region0: #{tpu_custom_call.1}
  #allocation0 [shape = 'u32[]', space=smem, size = 0x4, offset = 0x4, fixed_abs, tag = 'smem constant byte address 0x4 - core index']
  #allocation1 [shape = 'u32[144,128]{1,0:T(1,128)}', space=vmem, size = 0x12000, scoped, tag = 'internal scratch']
  #allocation2 [shape = 'f32[1]{0:T(128)S(6)}', space=smem, size = 0x200, scoped, tag = 'scoped memory for tpu_custom_call.1']
  %s0 = inlined_call_operand.vmem [shape: f32[1,128], index: 0, kind: input, shape index: {}]
  %s1 = inlined_call_operand.vmem [shape: f32[128,16], index: 1, kind: input, shape index: {}]
  %s2 = inlined_call_operand.<no memory space> [shape: f32[1], index: 2, kind: input, shape index: {}]
  %s3 = inlined_call_operand.hbm [shape: f32[1,16], index: 3, kind: output, shape index: {}]
  %s4 = sld [smem:[#allocation0]]
  $region22: #{tpu_custom_call.1} parent=0
    _
  %s6 = ssub.s32 1, %s4
  %s7 = scalar_select 0, %s6, %s4
  %8 = sst [smem:[#allocation2]] %s2
  $region1: #{tpu_custom_call.1} parent=0
    #allocation3 [shape = 'u8[4096]{0}', space=vmem, size = 0x1000, scoped, tag = 'output window, operand 0, single buffered']
    #allocation4 [shape = 's32[1]{0}', space=sflag, size = 0x4, scoped, tag = 'scoped memory for tpu_custom_call.1']
    %9 = vsyncpa [#allocation4], 0
    // Predicated region
    $region2: #{tpu_custom_call.1} parent=1 // pred_check
      _
    $region3: #{tpu_custom_call.1} parent=1 // pred_check_branch
      %11 = sbr.rel (0) target = $region5
    $region4: #{tpu_custom_call.1} parent=1 // pred_region
      _
    $region5: #{tpu_custom_call.1} parent=1 // pred_fallthru
      _
    // Predicated region
    $region6: #{tpu_custom_call.1} parent=1 // pred_check
      _
    $region7: #{tpu_custom_call.1} parent=1 // pred_check_branch
      %13 = sbr.rel (0) target = $region9
    $region8: #{tpu_custom_call.1} parent=1 // pred_region
      _
    $region9: #{tpu_custom_call.1} parent=1 // pred_fallthru
      _
    // Predicated region
    $region10: #{tpu_custom_call.1} parent=1 // pred_check
      _
    $region11: #{tpu_custom_call.1} parent=1 // pred_check_branch
      %15 = sbr.rel (0) target = $region13
    $region12: #{tpu_custom_call.1} parent=1 // pred_region
      _
    $region13: #{tpu_custom_call.1} parent=1 // pred_fallthru
      _
    %v16 = vld [vmem:[%s0] sm:$0xff]
    %v17 = vld [vmem:[%s1] sm:$0xff]
    %v18 = vld [vmem:[%s1 + $0x8] sm:$0xff]
    %v19 = vld [vmem:[%s1 + $0x10] sm:$0xff]
    %v20 = vld [vmem:[%s1 + $0x18] sm:$0xff]
    %v21 = vld [vmem:[%s1 + $0x20] sm:$0xff]
    %v22 = vld [vmem:[%s1 + $0x28] sm:$0xff]
    %v23 = vld [vmem:[%s1 + $0x30] sm:$0xff]
    %v24 = vld [vmem:[%s1 + $0x38] sm:$0xff]
    %v25 = vld [vmem:[%s1 + $0x40] sm:$0xff]
    %v26 = vld [vmem:[%s1 + $0x48] sm:$0xff]
    %v27 = vld [vmem:[%s1 + $0x50] sm:$0xff]
    %v28 = vld [vmem:[%s1 + $0x58] sm:$0xff]
    %v29 = vld [vmem:[%s1 + $0x60] sm:$0xff]
    %v30 = vld [vmem:[%s1 + $0x68] sm:$0xff]
    %v31 = vld [vmem:[%s1 + $0x70] sm:$0xff]
    %v32 = vld [vmem:[%s1 + $0x78] sm:$0xff]
    %s33 = sld [smem:[#allocation2]]
    %v34 = vstv %s33
    %35 = vmatprep.subr.mxu0 0.0
    %36 = vmatpush1.msra.mxu0 %v17
    %37 = vmatprep.subr.mxu0 0.0
    %38 = vmatpush1.msra.mxu0 %v18
    %39 = vmatprep.subr.mxu0 0.0
    %40 = vmatpush1.msra.mxu0 %v19
    %41 = vmatprep.subr.mxu0 0.0
    %42 = vmatpush1.msra.mxu0 %v20
    %43 = vmatprep.subr.mxu0 0.0
    %44 = vmatpush1.msra.mxu0 %v21
    %45 = vmatprep.subr.mxu0 0.0
    %46 = vmatpush1.msra.mxu0 %v22
    %47 = vmatprep.subr.mxu0 0.0
    %48 = vmatpush1.msra.mxu0 %v23
    %49 = vmatprep.subr.mxu0 0.0
    %50 = vmatpush1.msra.mxu0 %v24
    %51 = vmatprep.subr.mxu0 0.0
    %52 = vmatpush1.msra.mxu0 %v25
    %53 = vmatprep.subr.mxu0 0.0
    %54 = vmatpush1.msra.mxu0 %v26
    %55 = vmatprep.subr.mxu0 0.0
    %56 = vmatpush1.msra.mxu0 %v27
    %57 = vmatprep.subr.mxu0 0.0
    %58 = vmatpush1.msra.mxu0 %v28
    %59 = vmatprep.subr.mxu0 0.0
    %60 = vmatpush1.msra.mxu0 %v29
    %61 = vmatprep.subr.mxu0 0.0
    %62 = vmatpush1.msra.mxu0 %v30
    %63 = vmatprep.subr.mxu0 0.0
    %64 = vmatpush1.msra.mxu0 %v31
    %65 = vmatprep.subr.mxu0 0.0
    %66 = vmatpush1.msra.mxu0 %v32
    %67 = vmatprep.subr.mxu0 0.0
    %68 = vmatpush1.msra.mxu0 0.0
    %69 = vmatprep.subr.mxu0 0.0
    %70 = vmatpush1.msra.mxu0 0.0
    %71 = vmatprep.subr.mxu0 0.0
    %72 = vmatpush1.msra.mxu0 0.0
    %73 = vmatprep.subr.mxu0 0.0
    %74 = vmatpush1.msra.mxu0 0.0
    %75 = vmatprep.subr.mxu0 0.0
    %76 = vmatpush1.msra.mxu0 0.0
    %77 = vmatprep.subr.mxu0 0.0
    %78 = vmatpush1.msra.mxu0 0.0
    %79 = vmatprep.subr.mxu0 0.0
    %80 = vmatpush1.msra.mxu0 0.0
    %81 = vmatprep.subr.mxu0 0.0
    %82 = vmatpush1.msra.mxu0 0.0
    %83 = vmatprep.subr.mxu0 0.0
    %84 = vmatpush1.msra.mxu0 0.0
    %85 = vmatprep.subr.mxu0 0.0
    %86 = vmatpush1.msra.mxu0 0.0
    %87 = vmatprep.subr.mxu0 0.0
    %88 = vmatpush1.msra.mxu0 0.0
    %89 = vmatprep.subr.mxu0 0.0
    %90 = vmatpush1.msra.mxu0 0.0
    %91 = vmatprep.subr.mxu0 0.0
    %92 = vmatpush1.msra.mxu0 0.0
    %93 = vmatprep.subr.mxu0 0.0
    %94 = vmatpush1.msra.mxu0 0.0
    %95 = vmatprep.subr.mxu0 0.0
    %96 = vmatpush1.msra.mxu0 0.0
    %97 = vmatprep.subr.mxu0 0.0
    %98 = vmatpush1.msra.mxu0 0.0
    %99 = vmatprep.mubr.f32.mxu0 0.0
    %100 = vmatmul.mubr.f32.gmra.mrb[0].mxu0 %v16
    %v101 = vpop.f32.mrb[0].mxu0
    %v102 = vadd.f32 %v34, %v101
    %v103 = vpop.f32.mrb[0].mxu0
    %104 = vdwg.mxu0
    %v105 = vmax.f32 %v102, 0.0
    %vm106 = vcmask 130048
    %107 = vst.msk [vmem:[#allocation3] sm:$0xff] %vm106, %v105
    // Predicated region
    $region14: #{tpu_custom_call.1} parent=1 // pred_check
      _
    $region15: #{tpu_custom_call.1} parent=1 // pred_check_branch
      %109 = sbr.rel (0) target = $region17
    $region16: #{tpu_custom_call.1} parent=1 // pred_region
      %s111 = ssub.s32 128, 16
      %112 = vsyncadd [#allocation4], %s111
      %s113 = sshll.u32 [#allocation3], 4
      %s114 = int_to_ptr.vmem [resolvable:$true] %s113
      %119 = dma.vmem_to_hbm [thread:$0]  %s114, 16, %s3, [#allocation4], 16, 16, 1
    $region17: #{tpu_custom_call.1} parent=1 // pred_fallthru
      _
    // Predicated region
    $region18: #{tpu_custom_call.1} parent=1 // pred_check
      _
    $region19: #{tpu_custom_call.1} parent=1 // pred_check_branch
      %121 = sbr.rel (0) target = $region21
    $region20: #{tpu_custom_call.1} parent=1 // pred_region
      %122 = dma.done [#allocation4], 128
    $region21: #{tpu_custom_call.1} parent=1 // pred_fallthru
      _
    %123 = vsyncpa [#allocation4], 1

</llo_original>
